<compile_context>
chip_gen: v6e
topology: v6e:2x2x1
jax: 0.10.0
libtpu: 0.0.40
codegen_flags: <defaults>
</compile_context>

<pallas_src>
import functools

import jax
import jax.numpy as jnp
from jax.experimental import pallas as pl
from jax.experimental.pallas import tpu as pltpu


def drqn_kernel(obs_ref, h_ref, w1_ref, b1_ref, wg_ref, bg_ref, w2_ref, b2_ref,
                q_ref, hnew_ref):
    wdt = w1_ref.dtype                 # matmul operand dtype (bf16 by default)
    Hp = h_ref.shape[-1]               # lane-padded hidden width (multiple of 128)

    # fc1 + ReLU  (bf16 operands, f32 accumulation, f32 elementwise)
    x = jnp.dot(obs_ref[...].astype(wdt), w1_ref[...],
                preferred_element_type=jnp.float32)
    x = jnp.maximum(x + b1_ref[...], 0.0)

    h = h_ref[...]

    # One fused MXU call replaces the six GRU gate matmuls.
    # Wg layout (per 128-lane gate block): [Wir|Wiz|Win|0 ; Whr|Whz|0|Whn]
    xh = jnp.concatenate([x, h], axis=-1).astype(wdt)          # (B, 2*Hp)
    gates = (jnp.dot(xh, wg_ref[...], preferred_element_type=jnp.float32)
             + bg_ref[...])                                     # (B, 4*Hp)

    g_r = gates[:, 0 * Hp:1 * Hp]    # W_ir x + W_hr h + (b_ir + b_hr)
    g_z = gates[:, 1 * Hp:2 * Hp]    # W_iz x + W_hz h + (b_iz + b_hz)
    g_nx = gates[:, 2 * Hp:3 * Hp]   # W_in x + b_in
    g_nh = gates[:, 3 * Hp:4 * Hp]   # W_hn h + b_hn

    # PyTorch GRUCell gate order / grouping:
    #   r = sigmoid(...), z = sigmoid(...), n = tanh(g_nx + r*g_nh), h' = (1-z)n + z h
    r = jax.nn.sigmoid(g_r)
    z = jax.nn.sigmoid(g_z)
    n = jnp.tanh(g_nx + r * g_nh)
    h_new = (1.0 - z) * n + z * h

    hnew_ref[...] = h_new
    # fc2
    q_ref[...] = (jnp.dot(h_new.astype(wdt), w2_ref[...],
                          preferred_element_type=jnp.float32)
                  + b2_ref[...])


def pack_params(params, input_dim, hidden_dim, n_actions,
                lane=128, weight_dtype=jnp.bfloat16):
    """One-time parameter prep: pad to 128 lanes, fuse the GRU gate weights/biases."""
    (w1, b1, wir, wiz, win_, whr, whz, whn, br, bz, bin_, bhn, w2, b2) = params
    H = hidden_dim
    rup = lambda v: ((v + lane - 1) // lane) * lane
    Dp, Hp, Ap = rup(input_dim), rup(hidden_dim), rup(n_actions)

    w1_p = jnp.zeros((Dp, Hp), jnp.float32).at[:input_dim, :H].set(w1)
    b1_p = jnp.zeros((1, Hp), jnp.float32).at[:, :H].set(b1)

    # Fused gate weight (2*Hp, 4*Hp): rows [0,Hp) multiply x, rows [Hp,2Hp) multiply h.
    wg = jnp.zeros((2 * Hp, 4 * Hp), jnp.float32)
    wg = wg.at[:H, 0 * Hp:0 * Hp + H].set(wir)
    wg = wg.at[:H, 1 * Hp:1 * Hp + H].set(wiz)
    wg = wg.at[:H, 2 * Hp:2 * Hp + H].set(win_)
    wg = wg.at[Hp:Hp + H, 0 * Hp:0 * Hp + H].set(whr)
    wg = wg.at[Hp:Hp + H, 1 * Hp:1 * Hp + H].set(whz)
    wg = wg.at[Hp:Hp + H, 3 * Hp:3 * Hp + H].set(whn)

    bg = jnp.zeros((1, 4 * Hp), jnp.float32)
    bg = bg.at[:, 0 * Hp:0 * Hp + H].set(br)     # b_ir + b_hr
    bg = bg.at[:, 1 * Hp:1 * Hp + H].set(bz)     # b_iz + b_hz
    bg = bg.at[:, 2 * Hp:2 * Hp + H].set(bin_)   # b_in
    bg = bg.at[:, 3 * Hp:3 * Hp + H].set(bhn)    # b_hn

    w2_p = jnp.zeros((Hp, Ap), jnp.float32).at[:H, :n_actions].set(w2)
    b2_p = jnp.zeros((1, Ap), jnp.float32).at[:, :n_actions].set(b2)

    return (w1_p.astype(weight_dtype), b1_p,
            wg.astype(weight_dtype), bg,
            w2_p.astype(weight_dtype), b2_p)


def drqn_forward(obs, hidden_state, packed, rnn_hidden_dim, n_actions):
    """Mirrors DRQN.forward(obs, hidden_state) -> (q, h)."""
    (w1_p, b1_p, wg, bg, w2_p, b2_p) = packed
    B, input_dim = obs.shape
    Dp, Hp = w1_p.shape
    Ap = w2_p.shape[1]

    h_in = hidden_state.reshape(-1, rnn_hidden_dim)   # glue, like the PyTorch code

    # Batch blocking: one grid axis over batch blocks, marked "parallel".
    block_b = 128 if B >= 128 else max(8, ((B + 7) // 8) * 8)
    B_pad = ((B + block_b - 1) // block_b) * block_b

    obs_p = jnp.zeros((B_pad, Dp), jnp.float32).at[:B, :input_dim].set(obs)
    h_p = jnp.zeros((B_pad, Hp), jnp.float32).at[:B, :rnn_hidden_dim].set(h_in)

    batch_spec = lambda width: pl.BlockSpec((block_b, width), lambda i: (i, 0))
    resident = lambda arr: pl.BlockSpec(arr.shape, lambda i: (0, 0))  # VMEM-resident

    q_pad, h_new_pad = pl.pallas_call(
        drqn_kernel,
        out_shape=(jax.ShapeDtypeStruct((B_pad, Ap), jnp.float32),
                   jax.ShapeDtypeStruct((B_pad, Hp), jnp.float32)),
        grid=(B_pad // block_b,),
        in_specs=[
            batch_spec(Dp),                  # obs
            batch_spec(Hp),                  # hidden state
            resident(w1_p), resident(b1_p),  # fc1
            resident(wg), resident(bg),      # fused GRU gates
            resident(w2_p), resident(b2_p),  # fc2
        ],
        out_specs=(batch_spec(Ap), batch_spec(Hp)),
        compiler_params=pltpu.CompilerParams(
            dimension_semantics=("parallel",)),
    )(obs_p, h_p, w1_p, b1_p, wg, bg, w2_p, b2_p)

    # TODO(synk): if the caller scans this cell over T timesteps, move T into the grid
    # ("arbitrary" axis, weights resident, h kept in VMEM scratch, and alias h via
    # input_output_aliases) instead of re-launching per step; the PyTorch module's
    # forward is a single step, so a single-step kernel is kept here.
    return q_pad[:B, :n_actions], h_new_pad[:B, :rnn_hidden_dim]


def init_params(key, input_dim, hidden_dim, n_actions):
    """Deterministic synthetic parameters with the same shapes as the PyTorch module."""
    ks = jax.random.split(key, 16)
    s = 0.1
    w1 = s * jax.random.normal(ks[0], (input_dim, hidden_dim), jnp.float32)
    b1 = s * jax.random.normal(ks[1], (1, hidden_dim), jnp.float32)

    wir = s * jax.random.normal(ks[2], (hidden_dim, hidden_dim), jnp.float32)
    wiz = s * jax.random.normal(ks[3], (hidden_dim, hidden_dim), jnp.float32)
    win_ = s * jax.random.normal(ks[4], (hidden_dim, hidden_dim), jnp.float32)
    whr = s * jax.random.normal(ks[5], (hidden_dim, hidden_dim), jnp.float32)
    whz = s * jax.random.normal(ks[6], (hidden_dim, hidden_dim), jnp.float32)
    whn = s * jax.random.normal(ks[7], (hidden_dim, hidden_dim), jnp.float32)

    bir = s * jax.random.normal(ks[8], (1, hidden_dim), jnp.float32)
    biz = s * jax.random.normal(ks[9], (1, hidden_dim), jnp.float32)
    bin_ = s * jax.random.normal(ks[10], (1, hidden_dim), jnp.float32)
    bhr = s * jax.random.normal(ks[11], (1, hidden_dim), jnp.float32)
    bhz = s * jax.random.normal(ks[12], (1, hidden_dim), jnp.float32)
    bhn = s * jax.random.normal(ks[13], (1, hidden_dim), jnp.float32)

    # r/z gates only ever use the summed bias; n gate needs b_in and b_hn separately.
    br = bir + bhr
    bz = biz + bhz

    w2 = s * jax.random.normal(ks[14], (hidden_dim, n_actions), jnp.float32)
    b2 = s * jax.random.normal(ks[15], (1, n_actions), jnp.float32)

    return (w1, b1, wir, wiz, win_, whr, whz, whn, br, bz, bin_, bhn, w2, b2)


def drqn_reference(obs, hidden_state, params, rnn_hidden_dim,
                   matmul_dtype=jnp.float32):
    """Pure-JAX reference. matmul_dtype lets us precision-match the bf16 kernel."""
    (w1, b1, wir, wiz, win_, whr, whz, whn, br, bz, bin_, bhn, w2, b2) = params

    def mm(a, b):
        return jnp.dot(a.astype(matmul_dtype), b.astype(matmul_dtype),
                       preferred_element_type=jnp.float32)

    x = jnp.maximum(mm(obs, w1) + b1, 0.0)
    h = hidden_state.reshape(-1, rnn_hidden_dim)
    r = jax.nn.sigmoid(mm(x, wir) + mm(h, whr) + br)
    z = jax.nn.sigmoid(mm(x, wiz) + mm(h, whz) + bz)
    n = jnp.tanh(mm(x, win_) + bin_ + r * (mm(h, whn) + bhn))
    h_new = (1.0 - z) * n + z * h
    q = mm(h_new, w2) + b2
    return q, h_new


if __name__ == "__main__":
    B = 8            # batch (e.g. n_agents * episodes)
    INPUT_DIM = 32   # obs feature size
    HIDDEN = 32      # args.rnn_hidden_dim
    N_ACTIONS = 16   # args.n_actions

    key = jax.random.PRNGKey(0)
    k_obs, k_h, k_p = jax.random.split(key, 3)

    obs = jax.random.normal(k_obs, (B, INPUT_DIM), jnp.float32)
    hidden_state = jax.random.normal(k_h, (B, HIDDEN), jnp.float32)

    params = init_params(k_p, INPUT_DIM, HIDDEN, N_ACTIONS)
    packed = pack_params(params, INPUT_DIM, HIDDEN, N_ACTIONS)   # one-time prep

    fwd = jax.jit(drqn_forward, static_argnums=(3, 4))
    q, h = fwd(obs, hidden_state, packed, HIDDEN, N_ACTIONS)
    q = jax.block_until_ready(q)
    h = jax.block_until_ready(h)

    assert q.shape == (B, N_ACTIONS) and h.shape == (B, HIDDEN)

    # Precision-matched reference (same bf16 operands / f32 accumulation): tight check.
    q_ref, h_ref = drqn_reference(obs, hidden_state, params, HIDDEN,
                                  matmul_dtype=jnp.bfloat16)
    assert jnp.allclose(q, q_ref, atol=1e-3, rtol=1e-3)
    assert jnp.allclose(h, h_ref, atol=1e-3, rtol=1e-3)

    # Full-f32 reference (module semantics): loose check, accounts for bf16 operands.
    q32, h32 = drqn_reference(obs, hidden_state, params, HIDDEN,
                              matmul_dtype=jnp.float32)
    assert jnp.allclose(q, q32, atol=5e-2, rtol=5e-2)
    assert jnp.allclose(h, h32, atol=5e-2, rtol=5e-2)

    print("KERNEL_OK")
</pallas_src>

<mosaic_0001>
module attributes {stable_mosaic.version = 11 : i64} {
  func.func @drqn_kernel(%arg0: i32, %arg1: memref<8x128xf32, #tpu.memory_space<vmem>>, %arg2: memref<8x128xf32, #tpu.memory_space<vmem>>, %arg3: memref<128x128xbf16, #tpu.memory_space<vmem>>, %arg4: memref<1x128xf32, #tpu.memory_space<vmem>>, %arg5: memref<256x512xbf16, #tpu.memory_space<vmem>>, %arg6: memref<1x512xf32, #tpu.memory_space<vmem>>, %arg7: memref<128x128xbf16, #tpu.memory_space<vmem>>, %arg8: memref<1x128xf32, #tpu.memory_space<vmem>>, %arg9: memref<8x128xf32, #tpu.memory_space<vmem>>, %arg10: memref<8x128xf32, #tpu.memory_space<vmem>>) attributes {dimension_semantics = [#tpu.dimension_semantics<parallel>], iteration_bounds = array<i64: 1>, scalar_prefetch = 0 : i64, scratch_operands = 0 : i64, tpu.core_type = #tpu.core_type<tc>, window_params = [{transform_indices = @transform_0, window_bounds = array<i64: 8, 128>}, {transform_indices = @transform_1, window_bounds = array<i64: 8, 128>}, {pipeline_mode = #tpu.pipeline_mode<synchronous>, transform_indices = @transform_2, window_bounds = array<i64: 128, 128>}, {pipeline_mode = #tpu.pipeline_mode<synchronous>, transform_indices = @transform_3, window_bounds = array<i64: 1, 128>}, {pipeline_mode = #tpu.pipeline_mode<synchronous>, transform_indices = @transform_4, window_bounds = array<i64: 256, 512>}, {pipeline_mode = #tpu.pipeline_mode<synchronous>, transform_indices = @transform_5, window_bounds = array<i64: 1, 512>}, {pipeline_mode = #tpu.pipeline_mode<synchronous>, transform_indices = @transform_6, window_bounds = array<i64: 128, 128>}, {pipeline_mode = #tpu.pipeline_mode<synchronous>, transform_indices = @transform_7, window_bounds = array<i64: 1, 128>}, {transform_indices = @transform_8, window_bounds = array<i64: 8, 128>}, {transform_indices = @transform_9, window_bounds = array<i64: 8, 128>}]} {
    %c0 = arith.constant 0 : index
    %c0_0 = arith.constant 0 : index
    %0 = vector.load %arg1[%c0, %c0_0] : memref<8x128xf32, #tpu.memory_space<vmem>>, vector<8x128xf32>
    %1 = arith.truncf %0 : vector<8x128xf32> to vector<8x128xbf16>
    %c0_1 = arith.constant 0 : index
    %c0_2 = arith.constant 0 : index
    %2 = vector.load %arg3[%c0_1, %c0_2] : memref<128x128xbf16, #tpu.memory_space<vmem>>, vector<128x128xbf16>
    %cst = arith.constant dense<0.000000e+00> : vector<8x128xf32>
    %3 = tpu.matmul %1, %2, %cst {dimension_numbers = #tpu.dot_dimension_numbers<[1], [0], [0], [1], [0, 0, 1, 1], [], []>} : vector<8x128xbf16>, vector<128x128xbf16>, vector<8x128xf32> -> vector<8x128xf32>
    %c0_3 = arith.constant 0 : index
    %c0_4 = arith.constant 0 : index
    %4 = vector.load %arg4[%c0_3, %c0_4] : memref<1x128xf32, #tpu.memory_space<vmem>>, vector<1x128xf32>
    %5 = vector.broadcast %4 : vector<1x128xf32> to vector<8x128xf32>
    %6 = arith.addf %3, %5 : vector<8x128xf32>
    %cst_5 = arith.constant 0.000000e+00 : f32
    %7 = vector.broadcast %cst_5 : f32 to vector<8x128xf32>
    %8 = arith.maximumf %6, %7 : vector<8x128xf32>
    %c0_6 = arith.constant 0 : index
    %c0_7 = arith.constant 0 : index
    %9 = vector.load %arg2[%c0_6, %c0_7] : memref<8x128xf32, #tpu.memory_space<vmem>>, vector<8x128xf32>
    %10 = tpu.concatenate %8, %9 in 1 : vector<8x128xf32>, vector<8x128xf32> -> vector<8x256xf32>
    %11 = arith.truncf %10 : vector<8x256xf32> to vector<8x256xbf16>
    %c0_8 = arith.constant 0 : index
    %c0_9 = arith.constant 0 : index
    %12 = vector.load %arg5[%c0_8, %c0_9] : memref<256x512xbf16, #tpu.memory_space<vmem>>, vector<256x512xbf16>
    %cst_10 = arith.constant dense<0.000000e+00> : vector<8x512xf32>
    %13 = tpu.matmul %11, %12, %cst_10 {dimension_numbers = #tpu.dot_dimension_numbers<[1], [0], [0], [1], [0, 0, 1, 1], [], []>} : vector<8x256xbf16>, vector<256x512xbf16>, vector<8x512xf32> -> vector<8x512xf32>
    %c0_11 = arith.constant 0 : index
    %c0_12 = arith.constant 0 : index
    %14 = vector.load %arg6[%c0_11, %c0_12] : memref<1x512xf32, #tpu.memory_space<vmem>>, vector<1x512xf32>
    %15 = vector.broadcast %14 : vector<1x512xf32> to vector<8x512xf32>
    %16 = arith.addf %13, %15 : vector<8x512xf32>
    %17 = vector.extract_strided_slice %16 {offsets = [0, 0], sizes = [8, 128], strides = [1, 1]} : vector<8x512xf32> to vector<8x128xf32>
    %18 = vector.extract_strided_slice %16 {offsets = [0, 128], sizes = [8, 128], strides = [1, 1]} : vector<8x512xf32> to vector<8x128xf32>
    %19 = vector.extract_strided_slice %16 {offsets = [0, 256], sizes = [8, 128], strides = [1, 1]} : vector<8x512xf32> to vector<8x128xf32>
    %20 = vector.extract_strided_slice %16 {offsets = [0, 384], sizes = [8, 128], strides = [1, 1]} : vector<8x512xf32> to vector<8x128xf32>
    %21 = arith.negf %17 : vector<8x128xf32>
    %22 = math.exp %21 : vector<8x128xf32>
    %cst_13 = arith.constant 1.000000e+00 : f32
    %23 = vector.broadcast %cst_13 : f32 to vector<8x128xf32>
    %24 = arith.addf %23, %22 : vector<8x128xf32>
    %25 = arith.divf %23, %24 : vector<8x128xf32>
    %26 = arith.negf %18 : vector<8x128xf32>
    %27 = math.exp %26 : vector<8x128xf32>
    %cst_14 = arith.constant 1.000000e+00 : f32
    %28 = vector.broadcast %cst_14 : f32 to vector<8x128xf32>
    %29 = arith.addf %28, %27 : vector<8x128xf32>
    %30 = arith.divf %28, %29 : vector<8x128xf32>
    %31 = arith.mulf %25, %20 : vector<8x128xf32>
    %32 = arith.addf %19, %31 : vector<8x128xf32>
    %33 = math.tanh %32 : vector<8x128xf32>
    %cst_15 = arith.constant 1.000000e+00 : f32
    %34 = vector.broadcast %cst_15 : f32 to vector<8x128xf32>
    %35 = arith.subf %34, %30 : vector<8x128xf32>
    %36 = arith.mulf %35, %33 : vector<8x128xf32>
    %37 = arith.mulf %30, %9 : vector<8x128xf32>
    %38 = arith.addf %36, %37 : vector<8x128xf32>
    %c0_16 = arith.constant 0 : index
    %c0_17 = arith.constant 0 : index
    %39 = vector.load %arg10[%c0_16, %c0_17] : memref<8x128xf32, #tpu.memory_space<vmem>>, vector<8x128xf32>
    tpu.vector_store %arg10[%c0_16, %c0_17], %38 {strides = array<i32>} : memref<8x128xf32, #tpu.memory_space<vmem>>, vector<8x128xf32>,
    %40 = arith.truncf %38 : vector<8x128xf32> to vector<8x128xbf16>
    %c0_18 = arith.constant 0 : index
    %c0_19 = arith.constant 0 : index
    %41 = vector.load %arg7[%c0_18, %c0_19] : memref<128x128xbf16, #tpu.memory_space<vmem>>, vector<128x128xbf16>
    %cst_20 = arith.constant dense<0.000000e+00> : vector<8x128xf32>
    %42 = tpu.matmul %40, %41, %cst_20 {dimension_numbers = #tpu.dot_dimension_numbers<[1], [0], [0], [1], [0, 0, 1, 1], [], []>} : vector<8x128xbf16>, vector<128x128xbf16>, vector<8x128xf32> -> vector<8x128xf32>
    %c0_21 = arith.constant 0 : index
    %c0_22 = arith.constant 0 : index
    %43 = vector.load %arg8[%c0_21, %c0_22] : memref<1x128xf32, #tpu.memory_space<vmem>>, vector<1x128xf32>
    %44 = vector.broadcast %43 : vector<1x128xf32> to vector<8x128xf32>
    %45 = arith.addf %42, %44 : vector<8x128xf32>
    %c0_23 = arith.constant 0 : index
    %c0_24 = arith.constant 0 : index
    %46 = vector.load %arg9[%c0_23, %c0_24] : memref<8x128xf32, #tpu.memory_space<vmem>>, vector<8x128xf32>
    tpu.vector_store %arg9[%c0_23, %c0_24], %45 {strides = array<i32>} : memref<8x128xf32, #tpu.memory_space<vmem>>, vector<8x128xf32>,
    return
  }
  func.func @transform_0(%arg0: i32) -> (i32, i32) {
    %c0_i32 = arith.constant 0 : i32
    %c0_i32_0 = arith.constant 0 : i32
    return %arg0, %c0_i32 : i32, i32
  }
  func.func @transform_1(%arg0: i32) -> (i32, i32) {
    %c0_i32 = arith.constant 0 : i32
    %c0_i32_0 = arith.constant 0 : i32
    return %arg0, %c0_i32 : i32, i32
  }
  func.func @transform_2(%arg0: i32) -> (i32, i32) {
    %c0_i32 = arith.constant 0 : i32
    %c0_i32_0 = arith.constant 0 : i32
    %c0_i32_1 = arith.constant 0 : i32
    return %c0_i32, %c0_i32_0 : i32, i32
  }
  func.func @transform_3(%arg0: i32) -> (i32, i32) {
    %c0_i32 = arith.constant 0 : i32
    %c0_i32_0 = arith.constant 0 : i32
    %c0_i32_1 = arith.constant 0 : i32
    return %c0_i32, %c0_i32_0 : i32, i32
  }
  func.func @transform_4(%arg0: i32) -> (i32, i32) {
    %c0_i32 = arith.constant 0 : i32
    %c0_i32_0 = arith.constant 0 : i32
    %c0_i32_1 = arith.constant 0 : i32
    return %c0_i32, %c0_i32_0 : i32, i32
  }
  func.func @transform_5(%arg0: i32) -> (i32, i32) {
    %c0_i32 = arith.constant 0 : i32
    %c0_i32_0 = arith.constant 0 : i32
    %c0_i32_1 = arith.constant 0 : i32
    return %c0_i32, %c0_i32_0 : i32, i32
  }
  func.func @transform_6(%arg0: i32) -> (i32, i32) {
    %c0_i32 = arith.constant 0 : i32
    %c0_i32_0 = arith.constant 0 : i32
    %c0_i32_1 = arith.constant 0 : i32
    return %c0_i32, %c0_i32_0 : i32, i32
  }
  func.func @transform_7(%arg0: i32) -> (i32, i32) {
    %c0_i32 = arith.constant 0 : i32
    %c0_i32_0 = arith.constant 0 : i32
    %c0_i32_1 = arith.constant 0 : i32
    return %c0_i32, %c0_i32_0 : i32, i32
  }
  func.func @transform_8(%arg0: i32) -> (i32, i32) {
    %c0_i32 = arith.constant 0 : i32
    %c0_i32_0 = arith.constant 0 : i32
    return %arg0, %c0_i32 : i32, i32
  }
  func.func @transform_9(%arg0: i32) -> (i32, i32) {
    %c0_i32 = arith.constant 0 : i32
    %c0_i32_0 = arith.constant 0 : i32
    return %arg0, %c0_i32 : i32, i32
  }
}

</mosaic_0001>

<llo_original>
// kernel: drqn_forward.1
$region0: #{drqn_forward.1}
  #allocation0 [shape = 'u32[]', space=smem, size = 0x4, offset = 0x4, fixed_abs, tag = 'smem constant byte address 0x4 - core index']
  #allocation1 [shape = 'u32[144,128]{1,0:T(1,128)}', space=vmem, size = 0x12000, scoped, tag = 'internal scratch']
  %s0 = inlined_call_operand.vmem [shape: f32[8,128], index: 0, kind: input, shape index: {}]
  %s1 = inlined_call_operand.vmem [shape: f32[8,128], index: 1, kind: input, shape index: {}]
  %s2 = inlined_call_operand.vmem [shape: bf16[128,128], index: 2, kind: input, shape index: {}]
  %s3 = inlined_call_operand.vmem [shape: f32[1,128], index: 3, kind: input, shape index: {}]
  %s4 = inlined_call_operand.hbm [shape: bf16[256,512], index: 4, kind: input, shape index: {}]
  %s5 = inlined_call_operand.vmem [shape: f32[1,512], index: 5, kind: input, shape index: {}]
  %s6 = inlined_call_operand.hbm [shape: bf16[128,128], index: 6, kind: input, shape index: {}]
  %s7 = inlined_call_operand.vmem [shape: f32[1,128], index: 7, kind: input, shape index: {}]
  %s8 = inlined_call_operand.hbm [shape: f32[8,128], index: 8, kind: output, shape index: {0}]
  %s9 = inlined_call_operand.hbm [shape: f32[8,128], index: 9, kind: output, shape index: {1}]
  %10 = xla_tuple %s8, %s9
  %s11 = sld [smem:[#allocation0]]
  $region58: #{drqn_forward.1} parent=0
    _
  %s13 = ssub.s32 1, %s11
  %s14 = scalar_select 0, %s13, %s11
  $region1: #{drqn_forward.1} parent=0
    #allocation2 [shape = 'u8[262144]{0}', space=vmem, size = 0x40000, scoped, tag = 'input window, operand 4, single buffered']
    #allocation3 [shape = 's32[1]{0}', space=sflag, size = 0x4, scoped, tag = 'scoped memory for drqn_forward.1']
    #allocation4 [shape = 's32[1]{0}', space=sflag, size = 0x4, scoped, tag = 'scoped memory for drqn_forward.1']
    #allocation5 [shape = 'u8[32768]{0}', space=vmem, size = 0x8000, scoped, tag = 'input window, operand 6, single buffered']
    #allocation6 [shape = 's32[1]{0}', space=sflag, size = 0x4, scoped, tag = 'scoped memory for drqn_forward.1']
    #allocation7 [shape = 'u8[4096]{0}', space=vmem, size = 0x1000, scoped, tag = 'output window, operand 0, single buffered']
    #allocation8 [shape = 'u8[4096]{0}', space=vmem, size = 0x1000, scoped, tag = 'output window, operand 1, single buffered']
    #allocation9 [shape = 's32[1]{0}', space=sflag, size = 0x4, scoped, tag = 'scoped memory for drqn_forward.1']
    %15 = vsyncpa [#allocation3], 0
    %16 = vsyncpa [#allocation6], 0
    %17 = vsyncpa [#allocation4], 0
    %18 = vsyncpa [#allocation9], 0
    // Predicated region
    $region2: #{drqn_forward.1} parent=1 // pred_check
      _
    $region3: #{drqn_forward.1} parent=1 // pred_check_branch
      %20 = sbr.rel (0) target = $region5
    $region4: #{drqn_forward.1} parent=1 // pred_region
      _
    $region5: #{drqn_forward.1} parent=1 // pred_fallthru
      _
    // Predicated region
    $region6: #{drqn_forward.1} parent=1 // pred_check
      _
    $region7: #{drqn_forward.1} parent=1 // pred_check_branch
      %22 = sbr.rel (0) target = $region9
    $region8: #{drqn_forward.1} parent=1 // pred_region
      _
    $region9: #{drqn_forward.1} parent=1 // pred_fallthru
      _
    // Predicated region
    $region10: #{drqn_forward.1} parent=1 // pred_check
      _
    $region11: #{drqn_forward.1} parent=1 // pred_check_branch
      %24 = sbr.rel (0) target = $region13
    $region12: #{drqn_forward.1} parent=1 // pred_region
      _
    $region13: #{drqn_forward.1} parent=1 // pred_fallthru
      _
    // Predicated region
    $region14: #{drqn_forward.1} parent=1 // pred_check
      _
    $region15: #{drqn_forward.1} parent=1 // pred_check_branch
      %26 = sbr.rel (0) target = $region17
    $region16: #{drqn_forward.1} parent=1 // pred_region
      _
    $region17: #{drqn_forward.1} parent=1 // pred_fallthru
      _
    // Predicated region
    $region18: #{drqn_forward.1} parent=1 // pred_check
      _
    $region19: #{drqn_forward.1} parent=1 // pred_check_branch
      %28 = sbr.rel (0) target = $region21
    $region20: #{drqn_forward.1} parent=1 // pred_region
      %s30 = ssub.s32 8192, 8192
      %31 = vsyncadd [#allocation3], %s30
      %s32 = sshll.u32 [#allocation2], 4
      %s33 = int_to_ptr.vmem [resolvable:$true] %s32
      %38 = dma.hbm_to_vmem [thread:$0]  %s4, 8192, %s33, [#allocation3], 256, 256, 16
    $region21: #{drqn_forward.1} parent=1 // pred_fallthru
      _
    // Predicated region
    $region22: #{drqn_forward.1} parent=1 // pred_check
      _
    $region23: #{drqn_forward.1} parent=1 // pred_check_branch
      %40 = sbr.rel (0) target = $region25
    $region24: #{drqn_forward.1} parent=1 // pred_region
      _
    $region25: #{drqn_forward.1} parent=1 // pred_fallthru
      _
    // Predicated region
    $region26: #{drqn_forward.1} parent=1 // pred_check
      _
    $region27: #{drqn_forward.1} parent=1 // pred_check_branch
      %42 = sbr.rel (0) target = $region29
    $region28: #{drqn_forward.1} parent=1 // pred_region
      %s44 = ssub.s32 1024, 1024
      %45 = vsyncadd [#allocation6], %s44
      %s46 = sshll.u32 [#allocation5], 4
      %s47 = int_to_ptr.vmem [resolvable:$true] %s46
      %52 = dma.hbm_to_vmem [thread:$0]  %s6, 1024, %s47, [#allocation6], 64, 64, 4
    $region29: #{drqn_forward.1} parent=1 // pred_fallthru
      _
    // Predicated region
    $region30: #{drqn_forward.1} parent=1 // pred_check
      _
    $region31: #{drqn_forward.1} parent=1 // pred_check_branch
      %54 = sbr.rel (0) target = $region33
    $region32: #{drqn_forward.1} parent=1 // pred_region
      _
    $region33: #{drqn_forward.1} parent=1 // pred_fallthru
      _
    // Predicated region
    $region34: #{drqn_forward.1} parent=1 // pred_check
      _
    $region35: #{drqn_forward.1} parent=1 // pred_check_branch
      %56 = sbr.rel (0) target = $region37
    $region36: #{drqn_forward.1} parent=1 // pred_region
      %57 = dma.done [#allocation3], 8192
    $region37: #{drqn_forward.1} parent=1 // pred_fallthru
      _
    // Predicated region
    $region38: #{drqn_forward.1} parent=1 // pred_check
      _
    $region39: #{drqn_forward.1} parent=1 // pred_check_branch
      %59 = sbr.rel (0) target = $region41
    $region40: #{drqn_forward.1} parent=1 // pred_region
      %60 = dma.done [#allocation6], 1024
    $region41: #{drqn_forward.1} parent=1 // pred_fallthru
      _
    %v62 = vld [vmem:[%s0] sm:$0xff]
    %v63 = vpack.c.bf16 %v62, %v62
    %v64 = vld [vmem:[%s2] sm:$0xf]
    %v65 = vld [vmem:[%s2 + $0x4] sm:$0xf]
    %v66 = vld [vmem:[%s2 + $0x8] sm:$0xf]
    %v67 = vld [vmem:[%s2 + $0xc] sm:$0xf]
    %v68 = vld [vmem:[%s2 + $0x10] sm:$0xf]
    %v69 = vld [vmem:[%s2 + $0x14] sm:$0xf]
    %v70 = vld [vmem:[%s2 + $0x18] sm:$0xf]
    %v71 = vld [vmem:[%s2 + $0x1c] sm:$0xf]
    %v72 = vld [vmem:[%s2 + $0x20] sm:$0xf]
    %v73 = vld [vmem:[%s2 + $0x24] sm:$0xf]
    %v74 = vld [vmem:[%s2 + $0x28] sm:$0xf]
    %v75 = vld [vmem:[%s2 + $0x2c] sm:$0xf]
    %v76 = vld [vmem:[%s2 + $0x30] sm:$0xf]
    %v77 = vld [vmem:[%s2 + $0x34] sm:$0xf]
    %v78 = vld [vmem:[%s2 + $0x38] sm:$0xf]
    %v79 = vld [vmem:[%s2 + $0x3c] sm:$0xf]
    %v80 = vld [vmem:[%s3] sm:$0x1]
    %v82 = vlaneseq
    %v83 = vshrl.u32 %v82, 7
    %v84 = vsub.s32 0, %v83
    %v85 = vrot.slane %v80, %v84
    %v103 = vunpack.c.l.b16 %v64
    %v104 = vunpack.c.l.b16 %v65
    %v105 = vunpack.c.l.b16 %v66
    %v106 = vunpack.c.l.b16 %v67
    %v107 = vunpack.c.l.b16 %v68
    %v108 = vunpack.c.l.b16 %v69
    %v109 = vunpack.c.l.b16 %v70
    %v110 = vunpack.c.l.b16 %v71
    %v111 = vunpack.c.l.b16 %v72
    %v112 = vunpack.c.l.b16 %v73
    %v113 = vunpack.c.l.b16 %v74
    %v114 = vunpack.c.l.b16 %v75
    %v115 = vunpack.c.l.b16 %v76
    %v116 = vunpack.c.l.b16 %v77
    %v117 = vunpack.c.l.b16 %v78
    %v118 = vunpack.c.l.b16 %v79
    %v119 = vpack.c.b16 %v104, %v103
    %v120 = vpack.c.b16 %v106, %v105
    %v121 = vpack.c.b16 %v108, %v107
    %v122 = vpack.c.b16 %v110, %v109
    %v123 = vpack.c.b16 %v112, %v111
    %v124 = vpack.c.b16 %v114, %v113
    %v125 = vpack.c.b16 %v116, %v115
    %v126 = vpack.c.b16 %v118, %v117
    %135 = vmatprep.subr.bf16.mxu0 0
    %136 = vmatpush1.bf16.msra.mxu0 %v126
    %137 = vmatprep.subr.bf16.mxu0 0
    %138 = vmatpush1.bf16.msra.mxu0 %v125
    %139 = vmatprep.subr.bf16.mxu0 0
    %140 = vmatpush1.bf16.msra.mxu0 %v124
    %141 = vmatprep.subr.bf16.mxu0 0
    %142 = vmatpush1.bf16.msra.mxu0 %v123
    %143 = vmatprep.subr.bf16.mxu0 0
    %144 = vmatpush1.bf16.msra.mxu0 %v122
    %145 = vmatprep.subr.bf16.mxu0 0
    %146 = vmatpush1.bf16.msra.mxu0 %v121
    %147 = vmatprep.subr.bf16.mxu0 0
    %148 = vmatpush1.bf16.msra.mxu0 %v120
    %149 = vmatprep.subr.bf16.mxu0 0
    %150 = vmatpush1.bf16.msra.mxu0 %v119
    %151 = vmatprep.subr.bf16.mxu0 0
    %152 = vmatpush2.bf16.msra.mxu0 0
    %153 = vmatprep.subr.bf16.mxu0 0
    %154 = vmatpush2.bf16.msra.mxu0 0
    %155 = vmatprep.subr.bf16.mxu0 0
    %156 = vmatpush2.bf16.msra.mxu0 0
    %157 = vmatprep.subr.bf16.mxu0 0
    %158 = vmatpush2.bf16.msra.mxu0 0
    %159 = vmatprep.subr.bf16.mxu0 0
    %160 = vmatpush2.bf16.msra.mxu0 0
    %161 = vmatprep.subr.bf16.mxu0 0
    %162 = vmatpush2.bf16.msra.mxu0 0
    %163 = vmatprep.subr.bf16.mxu0 0
    %164 = vmatpush2.bf16.msra.mxu0 0
    %165 = vmatprep.subr.bf16.mxu0 0
    %166 = vmatpush2.bf16.msra.mxu0 0
    %167 = vmatprep.mubr.bf16.mxu0 0
    %168 = vmatmul.mubr.bf16.gmra.mxu0 %v63
    %v169 = vpop.f32.mrf.mxu0
    %v170 = vadd.f32 %v85, %v169
    %v171 = vpop.f32.mrf.mxu0
    %v172 = vpop.f32.mrf.mxu0
    %v173 = vpop.f32.mrf.mxu0
    %174 = vdwg.mxu0
    %v175 = vmax.f32 %v170, 0.0
    %v176 = vld [vmem:[%s1] sm:$0xff]
    %v177 = vpack.c.bf16 %v175, %v175
    %v178 = vpack.c.bf16 %v176, %v176
    %v179 = vld [vmem:[#allocation2] sm:$0xff]
    %v180 = vld [vmem:[#allocation2 + $0x8] sm:$0xff]
    %v181 = vld [vmem:[#allocation2 + $0x10] sm:$0xff]
    %v182 = vld [vmem:[#allocation2 + $0x18] sm:$0xff]
    %v183 = vld [vmem:[#allocation2 + $0x20] sm:$0xff]
    %v184 = vld [vmem:[#allocation2 + $0x28] sm:$0xff]
    %v185 = vld [vmem:[#allocation2 + $0x30] sm:$0xff]
    %v186 = vld [vmem:[#allocation2 + $0x38] sm:$0xff]
    %v187 = vld [vmem:[#allocation2 + $0x40] sm:$0xff]
    %v188 = vld [vmem:[#allocation2 + $0x48] sm:$0xff]
    %v189 = vld [vmem:[#allocation2 + $0x50] sm:$0xff]
    %v190 = vld [vmem:[#allocation2 + $0x58] sm:$0xff]
    %v191 = vld [vmem:[#allocation2 + $0x60] sm:$0xff]
    %v192 = vld [vmem:[#allocation2 + $0x68] sm:$0xff]
    %v193 = vld [vmem:[#allocation2 + $0x70] sm:$0xff]
    %v194 = vld [vmem:[#allocation2 + $0x78] sm:$0xff]
    %v195 = vld [vmem:[#allocation2 + $0x80] sm:$0xff]
    %v196 = vld [vmem:[#allocation2 + $0x88] sm:$0xff]
    %v197 = vld [vmem:[#allocation2 + $0x90] sm:$0xff]
    %v198 = vld [vmem:[#allocation2 + $0x98] sm:$0xff]
    %v199 = vld [vmem:[#allocation2 + $0xa0] sm:$0xff]
    %v200 = vld [vmem:[#allocation2 + $0xa8] sm:$0xff]
    %v201 = vld [vmem:[#allocation2 + $0xb0] sm:$0xff]
    %v202 = vld [vmem:[#allocation2 + $0xb8] sm:$0xff]
    %v203 = vld [vmem:[#allocation2 + $0xc0] sm:$0xff]
    %v204 = vld [vmem:[#allocation2 + $0xc8] sm:$0xff]
    %v205 = vld [vmem:[#allocation2 + $0xd0] sm:$0xff]
    %v206 = vld [vmem:[#allocation2 + $0xd8] sm:$0xff]
    %v207 = vld [vmem:[#allocation2 + $0xe0] sm:$0xff]
    %v208 = vld [vmem:[#allocation2 + $0xe8] sm:$0xff]
    %v209 = vld [vmem:[#allocation2 + $0xf0] sm:$0xff]
    %v210 = vld [vmem:[#allocation2 + $0xf8] sm:$0xff]
    %v211 = vld [vmem:[#allocation2 + $0x100] sm:$0xff]
    %v212 = vld [vmem:[#allocation2 + $0x108] sm:$0xff]
    %v213 = vld [vmem:[#allocation2 + $0x110] sm:$0xff]
    %v214 = vld [vmem:[#allocation2 + $0x118] sm:$0xff]
    %v215 = vld [vmem:[#allocation2 + $0x120] sm:$0xff]
    %v216 = vld [vmem:[#allocation2 + $0x128] sm:$0xff]
    %v217 = vld [vmem:[#allocation2 + $0x130] sm:$0xff]
    %v218 = vld [vmem:[#allocation2 + $0x138] sm:$0xff]
    %v219 = vld [vmem:[#allocation2 + $0x140] sm:$0xff]
    %v220 = vld [vmem:[#allocation2 + $0x148] sm:$0xff]
    %v221 = vld [vmem:[#allocation2 + $0x150] sm:$0xff]
    %v222 = vld [vmem:[#allocation2 + $0x158] sm:$0xff]
    %v223 = vld [vmem:[#allocation2 + $0x160] sm:$0xff]
    %v224 = vld [vmem:[#allocation2 + $0x168] sm:$0xff]
    %v225 = vld [vmem:[#allocation2 + $0x170] sm:$0xff]
    %v226 = vld [vmem:[#allocation2 + $0x178] sm:$0xff]
    %v227 = vld [vmem:[#allocation2 + $0x180] sm:$0xff]
    %v228 = vld [vmem:[#allocation2 + $0x188] sm:$0xff]
    %v229 = vld [vmem:[#allocation2 + $0x190] sm:$0xff]
    %v230 = vld [vmem:[#allocation2 + $0x198] sm:$0xff]
    %v231 = vld [vmem:[#allocation2 + $0x1a0] sm:$0xff]
    %v232 = vld [vmem:[#allocation2 + $0x1a8] sm:$0xff]
    %v233 = vld [vmem:[#allocation2 + $0x1b0] sm:$0xff]
    %v234 = vld [vmem:[#allocation2 + $0x1b8] sm:$0xff]
    %v235 = vld [vmem:[#allocation2 + $0x1c0] sm:$0xff]
    %v236 = vld [vmem:[#allocation2 + $0x1c8] sm:$0xff]
    %v237 = vld [vmem:[#allocation2 + $0x1d0] sm:$0xff]
    %v238 = vld [vmem:[#allocation2 + $0x1d8] sm:$0xff]
    %v239 = vld [vmem:[#allocation2 + $0x1e0] sm:$0xff]
    %v240 = vld [vmem:[#allocation2 + $0x1e8] sm:$0xff]
    %v241 = vld [vmem:[#allocation2 + $0x1f0] sm:$0xff]
    %v242 = vld [vmem:[#allocation2 + $0x1f8] sm:$0xff]
    %v243 = vld [vmem:[%s5] sm:$0xf]
    %v245 = vlaneseq
    %v246 = vshrl.u32 %v245, 7
    %v247 = vsub.s32 0, %v246
    %v248 = vrot.slane %v243, %v247
    %v249 = vlaneseq
    %v250 = vshrl.u32 %v249, 7
    %v251 = vsub.s32 1, %v250
    %v252 = vrot.slane %v243, %v251
    %v253 = vlaneseq
    %v254 = vshrl.u32 %v253, 7
    %v255 = vsub.s32 2, %v254
    %v256 = vrot.slane %v243, %v255
    %v257 = vlaneseq
    %v258 = vshrl.u32 %v257, 7
    %v259 = vsub.s32 3, %v258
    %v260 = vrot.slane %v243, %v259
    %v329 = vunpack.c.l.b16 %v179
    %v330 = vunpack.c.h.b16 %v179
    %v331 = vunpack.c.l.b16 %v180
    %v332 = vunpack.c.h.b16 %v180
    %v333 = vunpack.c.l.b16 %v181
    %v334 = vunpack.c.h.b16 %v181
    %v335 = vunpack.c.l.b16 %v182
    %v336 = vunpack.c.h.b16 %v182
    %v337 = vunpack.c.l.b16 %v183
    %v338 = vunpack.c.h.b16 %v183
    %v339 = vunpack.c.l.b16 %v184
    %v340 = vunpack.c.h.b16 %v184
    %v341 = vunpack.c.l.b16 %v185
    %v342 = vunpack.c.h.b16 %v185
    %v343 = vunpack.c.l.b16 %v186
    %v344 = vunpack.c.h.b16 %v186
    %v345 = vunpack.c.l.b16 %v187
    %v346 = vunpack.c.h.b16 %v187
    %v347 = vunpack.c.l.b16 %v188
    %v348 = vunpack.c.h.b16 %v188
    %v349 = vunpack.c.l.b16 %v189
    %v350 = vunpack.c.h.b16 %v189
    %v351 = vunpack.c.l.b16 %v190
    %v352 = vunpack.c.h.b16 %v190
    %v353 = vunpack.c.l.b16 %v191
    %v354 = vunpack.c.h.b16 %v191
    %v355 = vunpack.c.l.b16 %v192
    %v356 = vunpack.c.h.b16 %v192
    %v357 = vunpack.c.l.b16 %v193
    %v358 = vunpack.c.h.b16 %v193
    %v359 = vunpack.c.l.b16 %v194
    %v360 = vunpack.c.h.b16 %v194
    %v361 = vunpack.c.l.b16 %v195
    %v362 = vunpack.c.h.b16 %v195
    %v363 = vunpack.c.l.b16 %v196
    %v364 = vunpack.c.h.b16 %v196
    %v365 = vunpack.c.l.b16 %v197
    %v366 = vunpack.c.h.b16 %v197
    %v367 = vunpack.c.l.b16 %v198
    %v368 = vunpack.c.h.b16 %v198
    %v369 = vunpack.c.l.b16 %v199
    %v370 = vunpack.c.h.b16 %v199
    %v371 = vunpack.c.l.b16 %v200
    %v372 = vunpack.c.h.b16 %v200
    %v373 = vunpack.c.l.b16 %v201
    %v374 = vunpack.c.h.b16 %v201
    %v375 = vunpack.c.l.b16 %v202
    %v376 = vunpack.c.h.b16 %v202
    %v377 = vunpack.c.l.b16 %v203
    %v378 = vunpack.c.h.b16 %v203
    %v379 = vunpack.c.l.b16 %v204
    %v380 = vunpack.c.h.b16 %v204
    %v381 = vunpack.c.l.b16 %v205
    %v382 = vunpack.c.h.b16 %v205
    %v383 = vunpack.c.l.b16 %v206
    %v384 = vunpack.c.h.b16 %v206
    %v385 = vunpack.c.l.b16 %v207
    %v386 = vunpack.c.h.b16 %v207
    %v387 = vunpack.c.l.b16 %v208
    %v388 = vunpack.c.h.b16 %v208
    %v389 = vunpack.c.l.b16 %v209
    %v390 = vunpack.c.h.b16 %v209
    %v391 = vunpack.c.l.b16 %v210
    %v392 = vunpack.c.h.b16 %v210
    %v393 = vunpack.c.l.b16 %v211
    %v394 = vunpack.c.h.b16 %v211
    %v395 = vunpack.c.l.b16 %v212
    %v396 = vunpack.c.h.b16 %v212
    %v397 = vunpack.c.l.b16 %v213
    %v398 = vunpack.c.h.b16 %v213
    %v399 = vunpack.c.l.b16 %v214
    %v400 = vunpack.c.h.b16 %v214
    %v401 = vunpack.c.l.b16 %v215
    %v402 = vunpack.c.h.b16 %v215
    %v403 = vunpack.c.l.b16 %v216
    %v404 = vunpack.c.h.b16 %v216
    %v405 = vunpack.c.l.b16 %v217
    %v406 = vunpack.c.h.b16 %v217
    %v407 = vunpack.c.l.b16 %v218
    %v408 = vunpack.c.h.b16 %v218
    %v409 = vunpack.c.l.b16 %v219
    %v410 = vunpack.c.h.b16 %v219
    %v411 = vunpack.c.l.b16 %v220
    %v412 = vunpack.c.h.b16 %v220
    %v413 = vunpack.c.l.b16 %v221
    %v414 = vunpack.c.h.b16 %v221
    %v415 = vunpack.c.l.b16 %v222
    %v416 = vunpack.c.h.b16 %v222
    %v417 = vunpack.c.l.b16 %v223
    %v418 = vunpack.c.h.b16 %v223
    %v419 = vunpack.c.l.b16 %v224
    %v420 = vunpack.c.h.b16 %v224
    %v421 = vunpack.c.l.b16 %v225
    %v422 = vunpack.c.h.b16 %v225
    %v423 = vunpack.c.l.b16 %v226
    %v424 = vunpack.c.h.b16 %v226
    %v425 = vunpack.c.l.b16 %v227
    %v426 = vunpack.c.h.b16 %v227
    %v427 = vunpack.c.l.b16 %v228
    %v428 = vunpack.c.h.b16 %v228
    %v429 = vunpack.c.l.b16 %v229
    %v430 = vunpack.c.h.b16 %v229
    %v431 = vunpack.c.l.b16 %v230
    %v432 = vunpack.c.h.b16 %v230
    %v433 = vunpack.c.l.b16 %v231
    %v434 = vunpack.c.h.b16 %v231
    %v435 = vunpack.c.l.b16 %v232
    %v436 = vunpack.c.h.b16 %v232
    %v437 = vunpack.c.l.b16 %v233
    %v438 = vunpack.c.h.b16 %v233
    %v439 = vunpack.c.l.b16 %v234
    %v440 = vunpack.c.h.b16 %v234
    %v441 = vunpack.c.l.b16 %v235
    %v442 = vunpack.c.h.b16 %v235
    %v443 = vunpack.c.l.b16 %v236
    %v444 = vunpack.c.h.b16 %v236
    %v445 = vunpack.c.l.b16 %v237
    %v446 = vunpack.c.h.b16 %v237
    %v447 = vunpack.c.l.b16 %v238
    %v448 = vunpack.c.h.b16 %v238
    %v449 = vunpack.c.l.b16 %v239
    %v450 = vunpack.c.h.b16 %v239
    %v451 = vunpack.c.l.b16 %v240
    %v452 = vunpack.c.h.b16 %v240
    %v453 = vunpack.c.l.b16 %v241
    %v454 = vunpack.c.h.b16 %v241
    %v455 = vunpack.c.l.b16 %v242
    %v456 = vunpack.c.h.b16 %v242
    %v457 = vpack.c.b16 %v333, %v329
    %v458 = vpack.c.b16 %v334, %v330
    %v459 = vpack.c.b16 %v335, %v331
    %v460 = vpack.c.b16 %v336, %v332
    %v461 = vpack.c.b16 %v341, %v337
    %v462 = vpack.c.b16 %v342, %v338
    %v463 = vpack.c.b16 %v343, %v339
    %v464 = vpack.c.b16 %v344, %v340
    %v465 = vpack.c.b16 %v349, %v345
    %v466 = vpack.c.b16 %v350, %v346
    %v467 = vpack.c.b16 %v351, %v347
    %v468 = vpack.c.b16 %v352, %v348
    %v469 = vpack.c.b16 %v357, %v353
    %v470 = vpack.c.b16 %v358, %v354
    %v471 = vpack.c.b16 %v359, %v355
    %v472 = vpack.c.b16 %v360, %v356
    %v473 = vpack.c.b16 %v365, %v361
    %v474 = vpack.c.b16 %v366, %v362
    %v475 = vpack.c.b16 %v367, %v363
    %v476 = vpack.c.b16 %v368, %v364
    %v477 = vpack.c.b16 %v373, %v369
    %v478 = vpack.c.b16 %v374, %v370
    %v479 = vpack.c.b16 %v375, %v371
    %v480 = vpack.c.b16 %v376, %v372
    %v481 = vpack.c.b16 %v381, %v377
    %v482 = vpack.c.b16 %v382, %v378
    %v483 = vpack.c.b16 %v383, %v379
    %v484 = vpack.c.b16 %v384, %v380
    %v485 = vpack.c.b16 %v389, %v385
    %v486 = vpack.c.b16 %v390, %v386
    %v487 = vpack.c.b16 %v391, %v387
    %v488 = vpack.c.b16 %v392, %v388
    %v489 = vpack.c.b16 %v397, %v393
    %v490 = vpack.c.b16 %v398, %v394
    %v491 = vpack.c.b16 %v399, %v395
    %v492 = vpack.c.b16 %v400, %v396
    %v493 = vpack.c.b16 %v405, %v401
    %v494 = vpack.c.b16 %v406, %v402
    %v495 = vpack.c.b16 %v407, %v403
    %v496 = vpack.c.b16 %v408, %v404
    %v497 = vpack.c.b16 %v413, %v409
    %v498 = vpack.c.b16 %v414, %v410
    %v499 = vpack.c.b16 %v415, %v411
    %v500 = vpack.c.b16 %v416, %v412
    %v501 = vpack.c.b16 %v421, %v417
    %v502 = vpack.c.b16 %v422, %v418
    %v503 = vpack.c.b16 %v423, %v419
    %v504 = vpack.c.b16 %v424, %v420
    %v505 = vpack.c.b16 %v429, %v425
    %v506 = vpack.c.b16 %v430, %v426
    %v507 = vpack.c.b16 %v431, %v427
    %v508 = vpack.c.b16 %v432, %v428
    %v509 = vpack.c.b16 %v437, %v433
    %v510 = vpack.c.b16 %v438, %v434
    %v511 = vpack.c.b16 %v439, %v435
    %v512 = vpack.c.b16 %v440, %v436
    %v513 = vpack.c.b16 %v445, %v441
    %v514 = vpack.c.b16 %v446, %v442
    %v515 = vpack.c.b16 %v447, %v443
    %v516 = vpack.c.b16 %v448, %v444
    %v517 = vpack.c.b16 %v453, %v449
    %v518 = vpack.c.b16 %v454, %v450
    %v519 = vpack.c.b16 %v455, %v451
    %v520 = vpack.c.b16 %v456, %v452
    %585 = vmatprep.subr.bf16.mxu0 %v486
    %586 = vmatpush1.bf16.msra.mxu0 %v485
    %587 = vmatprep.subr.bf16.mxu0 %v482
    %588 = vmatpush1.bf16.msra.mxu0 %v481
    %589 = vmatprep.subr.bf16.mxu0 %v478
    %590 = vmatpush1.bf16.msra.mxu0 %v477
    %591 = vmatprep.subr.bf16.mxu0 %v474
    %592 = vmatpush1.bf16.msra.mxu0 %v473
    %593 = vmatprep.subr.bf16.mxu0 %v470
    %594 = vmatpush1.bf16.msra.mxu0 %v469
    %595 = vmatprep.subr.bf16.mxu0 %v466
    %596 = vmatpush1.bf16.msra.mxu0 %v465
    %597 = vmatprep.subr.bf16.mxu0 %v462
    %598 = vmatpush1.bf16.msra.mxu0 %v461
    %599 = vmatprep.subr.bf16.mxu0 %v458
    %600 = vmatpush1.bf16.msra.mxu0 %v457
    %601 = vmatprep.subr.bf16.mxu0 %v518
    %602 = vmatpush2.bf16.msra.mxu0 %v517
    %603 = vmatprep.subr.bf16.mxu0 %v514
    %604 = vmatpush2.bf16.msra.mxu0 %v513
    %605 = vmatprep.subr.bf16.mxu0 %v510
    %606 = vmatpush2.bf16.msra.mxu0 %v509
    %607 = vmatprep.subr.bf16.mxu0 %v506
    %608 = vmatpush2.bf16.msra.mxu0 %v505
    %609 = vmatprep.subr.bf16.mxu0 %v502
    %610 = vmatpush2.bf16.msra.mxu0 %v501
    %611 = vmatprep.subr.bf16.mxu0 %v498
    %612 = vmatpush2.bf16.msra.mxu0 %v497
    %613 = vmatprep.subr.bf16.mxu0 %v494
    %614 = vmatpush2.bf16.msra.mxu0 %v493
    %615 = vmatprep.subr.bf16.mxu0 %v490
    %616 = vmatpush2.bf16.msra.mxu0 %v489
    %617 = vmatprep.mubr.bf16.mxu0 %v178
    %618 = vmatmul.mubr.bf16.gmra.mxu0 %v177
    %v619 = vpop.f32.mrf.mxu0
    %v620 = vadd.f32 %v248, %v619
    %v621 = vpop.f32.mrf.mxu0
    %v622 = vadd.f32 %v252, %v621
    %v623 = vpop.f32.mrf.mxu0
    %v624 = vpop.f32.mrf.mxu0
    %625 = vdwg.mxu0
    %626 = vmatprep.subr.bf16.mxu0 %v488
    %627 = vmatpush1.bf16.msra.mxu0 %v487
    %628 = vmatprep.subr.bf16.mxu0 %v484
    %629 = vmatpush1.bf16.msra.mxu0 %v483
    %630 = vmatprep.subr.bf16.mxu0 %v480
    %631 = vmatpush1.bf16.msra.mxu0 %v479
    %632 = vmatprep.subr.bf16.mxu0 %v476
    %633 = vmatpush1.bf16.msra.mxu0 %v475
    %634 = vmatprep.subr.bf16.mxu0 %v472
    %635 = vmatpush1.bf16.msra.mxu0 %v471
    %636 = vmatprep.subr.bf16.mxu0 %v468
    %637 = vmatpush1.bf16.msra.mxu0 %v467
    %638 = vmatprep.subr.bf16.mxu0 %v464
    %639 = vmatpush1.bf16.msra.mxu0 %v463
    %640 = vmatprep.subr.bf16.mxu0 %v460
    %641 = vmatpush1.bf16.msra.mxu0 %v459
    %642 = vmatprep.subr.bf16.mxu0 %v520
    %643 = vmatpush2.bf16.msra.mxu0 %v519
    %644 = vmatprep.subr.bf16.mxu0 %v516
    %645 = vmatpush2.bf16.msra.mxu0 %v515
    %646 = vmatprep.subr.bf16.mxu0 %v512
    %647 = vmatpush2.bf16.msra.mxu0 %v511
    %648 = vmatprep.subr.bf16.mxu0 %v508
    %649 = vmatpush2.bf16.msra.mxu0 %v507
    %650 = vmatprep.subr.bf16.mxu0 %v504
    %651 = vmatpush2.bf16.msra.mxu0 %v503
    %652 = vmatprep.subr.bf16.mxu0 %v500
    %653 = vmatpush2.bf16.msra.mxu0 %v499
    %654 = vmatprep.subr.bf16.mxu0 %v496
    %655 = vmatpush2.bf16.msra.mxu0 %v495
    %656 = vmatprep.subr.bf16.mxu0 %v492
    %657 = vmatpush2.bf16.msra.mxu0 %v491
    %658 = vmatprep.mubr.bf16.mxu0 %v178
    %659 = vmatmul.mubr.bf16.gmra.mxu0 %v177
    %v660 = vpop.f32.mrf.mxu0
    %v661 = vadd.f32 %v256, %v660
    %v662 = vpop.f32.mrf.mxu0
    %v663 = vadd.f32 %v260, %v662
    %v664 = vpop.f32.mrf.mxu0
    %v665 = vpop.f32.mrf.mxu0
    %666 = vdwg.mxu0
    %v667 = vxor.u32 %v620, 2147483648
    %v668 = vmul.f32 %v667, 1.442695
    %v669 = vpow.pop %v668
    %v670 = vadd.f32 %v669, 1.0
    %v671 = vrcp.pop %v670
    %v672 = vmul.f32 1.0, %v671
    %v673 = vxor.u32 %v622, 2147483648
    %v674 = vmul.f32 %v673, 1.442695
    %v675 = vpow.pop %v674
    %v676 = vadd.f32 %v675, 1.0
    %v677 = vrcp.pop %v676
    %v678 = vmul.f32 1.0, %v677
    %v679 = vmul.f32 %v672, %v663
    %v680 = vadd.f32 %v661, %v679
    %v681 = vtanh.pop %v680
    %v682 = vsub.f32 1.0, %v678
    %v683 = vmul.f32 %v682, %v681
    %v684 = vmul.f32 %v678, %v176
    %v685 = vadd.f32 %v683, %v684
    %686 = vst [vmem:[#allocation8] sm:$0xff] %v685
    %v687 = vpack.c.bf16 %v685, %v685
    %v688 = vld [vmem:[#allocation5] sm:$0xf]
    %v689 = vld [vmem:[#allocation5 + $0x4] sm:$0xf]
    %v690 = vld [vmem:[#allocation5 + $0x8] sm:$0xf]
    %v691 = vld [vmem:[#allocation5 + $0xc] sm:$0xf]
    %v692 = vld [vmem:[#allocation5 + $0x10] sm:$0xf]
    %v693 = vld [vmem:[#allocation5 + $0x14] sm:$0xf]
    %v694 = vld [vmem:[#allocation5 + $0x18] sm:$0xf]
    %v695 = vld [vmem:[#allocation5 + $0x1c] sm:$0xf]
    %v696 = vld [vmem:[#allocation5 + $0x20] sm:$0xf]
    %v697 = vld [vmem:[#allocation5 + $0x24] sm:$0xf]
    %v698 = vld [vmem:[#allocation5 + $0x28] sm:$0xf]
    %v699 = vld [vmem:[#allocation5 + $0x2c] sm:$0xf]
    %v700 = vld [vmem:[#allocation5 + $0x30] sm:$0xf]
    %v701 = vld [vmem:[#allocation5 + $0x34] sm:$0xf]
    %v702 = vld [vmem:[#allocation5 + $0x38] sm:$0xf]
    %v703 = vld [vmem:[#allocation5 + $0x3c] sm:$0xf]
    %v704 = vld [vmem:[%s7] sm:$0x1]
    %v706 = vlaneseq
    %v707 = vshrl.u32 %v706, 7
    %v708 = vsub.s32 0, %v707
    %v709 = vrot.slane %v704, %v708
    %v727 = vunpack.c.l.b16 %v688
    %v728 = vunpack.c.l.b16 %v689
    %v729 = vunpack.c.l.b16 %v690
    %v730 = vunpack.c.l.b16 %v691
    %v731 = vunpack.c.l.b16 %v692
    %v732 = vunpack.c.l.b16 %v693
    %v733 = vunpack.c.l.b16 %v694
    %v734 = vunpack.c.l.b16 %v695
    %v735 = vunpack.c.l.b16 %v696
    %v736 = vunpack.c.l.b16 %v697
    %v737 = vunpack.c.l.b16 %v698
    %v738 = vunpack.c.l.b16 %v699
    %v739 = vunpack.c.l.b16 %v700
    %v740 = vunpack.c.l.b16 %v701
    %v741 = vunpack.c.l.b16 %v702
    %v742 = vunpack.c.l.b16 %v703
    %v743 = vpack.c.b16 %v728, %v727
    %v744 = vpack.c.b16 %v730, %v729
    %v745 = vpack.c.b16 %v732, %v731
    %v746 = vpack.c.b16 %v734, %v733
    %v747 = vpack.c.b16 %v736, %v735
    %v748 = vpack.c.b16 %v738, %v737
    %v749 = vpack.c.b16 %v740, %v739
    %v750 = vpack.c.b16 %v742, %v741
    %759 = vmatprep.subr.bf16.mxu0 0
    %760 = vmatpush1.bf16.msra.mxu0 %v750
    %761 = vmatprep.subr.bf16.mxu0 0
    %762 = vmatpush1.bf16.msra.mxu0 %v749
    %763 = vmatprep.subr.bf16.mxu0 0
    %764 = vmatpush1.bf16.msra.mxu0 %v748
    %765 = vmatprep.subr.bf16.mxu0 0
    %766 = vmatpush1.bf16.msra.mxu0 %v747
    %767 = vmatprep.subr.bf16.mxu0 0
    %768 = vmatpush1.bf16.msra.mxu0 %v746
    %769 = vmatprep.subr.bf16.mxu0 0
    %770 = vmatpush1.bf16.msra.mxu0 %v745
    %771 = vmatprep.subr.bf16.mxu0 0
    %772 = vmatpush1.bf16.msra.mxu0 %v744
    %773 = vmatprep.subr.bf16.mxu0 0
    %774 = vmatpush1.bf16.msra.mxu0 %v743
    %775 = vmatprep.subr.bf16.mxu0 0
    %776 = vmatpush2.bf16.msra.mxu0 0
    %777 = vmatprep.subr.bf16.mxu0 0
    %778 = vmatpush2.bf16.msra.mxu0 0
    %779 = vmatprep.subr.bf16.mxu0 0
    %780 = vmatpush2.bf16.msra.mxu0 0
    %781 = vmatprep.subr.bf16.mxu0 0
    %782 = vmatpush2.bf16.msra.mxu0 0
    %783 = vmatprep.subr.bf16.mxu0 0
    %784 = vmatpush2.bf16.msra.mxu0 0
    %785 = vmatprep.subr.bf16.mxu0 0
    %786 = vmatpush2.bf16.msra.mxu0 0
    %787 = vmatprep.subr.bf16.mxu0 0
    %788 = vmatpush2.bf16.msra.mxu0 0
    %789 = vmatprep.subr.bf16.mxu0 0
    %790 = vmatpush2.bf16.msra.mxu0 0
    %791 = vmatprep.mubr.bf16.mxu0 0
    %792 = vmatmul.mubr.bf16.gmra.mxu0 %v687
    %v793 = vpop.f32.mrf.mxu0
    %v794 = vadd.f32 %v709, %v793
    %v795 = vpop.f32.mrf.mxu0
    %v796 = vpop.f32.mrf.mxu0
    %v797 = vpop.f32.mrf.mxu0
    %798 = vdwg.mxu0
    %799 = vst [vmem:[#allocation7] sm:$0xff] %v794
    // Predicated region
    $region42: #{drqn_forward.1} parent=1 // pred_check
      _
    $region43: #{drqn_forward.1} parent=1 // pred_check_branch
      %801 = sbr.rel (0) target = $region45
    $region44: #{drqn_forward.1} parent=1 // pred_region
      %s803 = ssub.s32 128, 128
      %804 = vsyncadd [#allocation4], %s803
      %s806 = sshll.u32 [#allocation7], 4
      %s807 = int_to_ptr.vmem [resolvable:$true] %s806
      %809 = dma.vmem_to_hbm [thread:$0]  %s807, 128, %s8, [#allocation4]
    $region45: #{drqn_forward.1} parent=1 // pred_fallthru
      _
    // Predicated region
    $region46: #{drqn_forward.1} parent=1 // pred_check
      _
    $region47: #{drqn_forward.1} parent=1 // pred_check_branch
      %811 = sbr.rel (0) target = $region49
    $region48: #{drqn_forward.1} parent=1 // pred_region
      %s813 = ssub.s32 128, 128
      %814 = vsyncadd [#allocation9], %s813
      %s816 = sshll.u32 [#allocation8], 4
      %s817 = int_to_ptr.vmem [resolvable:$true] %s816
      %819 = dma.vmem_to_hbm [thread:$0]  %s817, 128, %s9, [#allocation9]
    $region49: #{drqn_forward.1} parent=1 // pred_fallthru
      _
    // Predicated region
    $region50: #{drqn_forward.1} parent=1 // pred_check
      _
    $region51: #{drqn_forward.1} parent=1 // pred_check_branch
      %821 = sbr.rel (0) target = $region53
    $region52: #{drqn_forward.1} parent=1 // pred_region
      %822 = dma.done [#allocation4], 128
    $region53: #{drqn_forward.1} parent=1 // pred_fallthru
      _
    // Predicated region
    $region54: #{drqn_forward.1} parent=1 // pred_check
      _
    $region55: #{drqn_forward.1} parent=1 // pred_check_branch
      %824 = sbr.rel (0) target = $region57
    $region56: #{drqn_forward.1} parent=1 // pred_region
      %825 = dma.done [#allocation9], 128
    $region57: #{drqn_forward.1} parent=1 // pred_fallthru
      _
    %826 = vsyncpa [#allocation3], 1
    %827 = vsyncpa [#allocation6], 1
    %828 = vsyncpa [#allocation4], 1
    %829 = vsyncpa [#allocation9], 1

</llo_original>
